<compile_context>
chip_gen: v7x
topology: tpu7x:2x2x1
jax: 0.10.0
libtpu: 0.0.40
codegen_flags: <defaults>
</compile_context>

<pallas_src>
import functools

import jax
import jax.numpy as jnp
from jax.experimental import pallas as pl
from jax.experimental.pallas import tpu as pltpu


def _round_up(x, m):
    return (x + m - 1) // m * m


def _vmem_capacity_bytes():
    """Physical VMEM of the current chip generation (conservative fallback: 64 MiB)."""
    try:
        info = pltpu.get_tpu_info()
        cap = getattr(info, "vmem_capacity_bytes", None)
        if cap:
            return int(cap)
    except Exception:
        pass
    return 64 * 1024 * 1024


def _pick_tiles(n, c, itemsize, budget):
    """Pick (row_tile, class_tile) to fit `budget` bytes of VMEM."""
    n_rows = _round_up(max(n, 1), 8)

    def per_row(tc):
        # double-buffered input block + ~5 C-wide f32/int32 temporaries.
        return 2 * tc * itemsize + 5 * tc * 4

    # Prefer a full-C block (single class step) when it still allows either a decent
    # row count or a multi-MiB input slab (amortizes ~0.35us per grid step).
    tm_full = budget // per_row(c)
    slab_ok = tm_full * c * itemsize >= (4 << 20)
    if tm_full >= 8 and (tm_full >= min(n_rows, 256) or slab_ok):
        tm = min(1024, tm_full, n_rows)
        tm = max(8, (tm // 8) * 8)
        return int(tm), int(c)

    # Vocab-scale C: split the class axis, keep row tiles large (online logsumexp).
    tm = min(512, n_rows)
    tm = max(8, (tm // 8) * 8)
    tc = budget // (tm * (2 * itemsize + 20))
    tc = max(128, (tc // 128) * 128)
    tc = min(tc, c)
    return int(tm), int(tc)


def _ls_ce_kernel(pred_ref, tgt_ref, out_ref, m_sc, l_sc, sx_sc, xt_sc, *,
                  smoothing, confidence, c_real, tc, mask_cols):
    """Grid = (row_tiles [parallel], class_tiles [arbitrary]).

    Carries per-row online-logsumexp state (max, sumexp), sum(x) and x[target] across
    the class axis in VMEM scratch; emits a lane-dense (8,128) partial block per row
    tile: [0,0] = -sum(true_dist*logp) over valid rows, [0,1] = valid-row count.
    """
    k = pl.program_id(1)

    @pl.when(k == 0)
    def _():
        m_sc[...] = jnp.full_like(m_sc, -jnp.inf)
        l_sc[...] = jnp.zeros_like(l_sc)
        sx_sc[...] = jnp.zeros_like(sx_sc)
        xt_sc[...] = jnp.zeros_like(xt_sc)

    x = pred_ref[...].astype(jnp.float32)                       # (TM, TC)
    tgt = tgt_ref[...]                                          # (TM, 1) int32
    col = jax.lax.broadcasted_iota(jnp.int32, x.shape, 1) + k * tc

    if mask_cols:                                               # static: class padding present
        valid = col < c_real
        x_max = jnp.where(valid, x, -jnp.inf)
        x_sum = jnp.where(valid, x, 0.0)
    else:
        x_max = x
        x_sum = x

    # Online logsumexp across class blocks.
    m_prev = m_sc[...]
    m_new = jnp.maximum(m_prev, jnp.max(x_max, axis=-1, keepdims=True))
    alpha = jnp.exp(m_prev - m_new)
    l_sc[...] = alpha * l_sc[...] + jnp.sum(jnp.exp(x_max - m_new), axis=-1, keepdims=True)
    m_sc[...] = m_new
    # Running sum(x) and x[target] (target never matches a padded column / -100).
    sx_sc[...] = sx_sc[...] + jnp.sum(x_sum, axis=-1, keepdims=True)
    xt_sc[...] = xt_sc[...] + jnp.sum(jnp.where(col == tgt, x, 0.0), axis=-1, keepdims=True)

    @pl.when(k == pl.num_programs(1) - 1)
    def _():
        lse = m_sc[...] + jnp.log(l_sc[...])                    # (TM, 1) logsumexp(x)
        smooth_val = smoothing / (c_real - 1)
        mask = (tgt != -100).astype(jnp.float32)                # (TM, 1); 0 for ignored/pad rows
        # Folded form of -sum_c(true_dist_c * logp_c) per row.
        loss_row = (smooth_val * (c_real * lse - sx_sc[...])
                    + (confidence - smooth_val) * (lse - xt_sc[...]))
        partial_loss = jnp.sum(loss_row * mask)
        partial_cnt = jnp.sum(mask)

        rows = jax.lax.broadcasted_iota(jnp.int32, out_ref.shape, 0)
        cols = jax.lax.broadcasted_iota(jnp.int32, out_ref.shape, 1)
        blk = jnp.where((rows == 0) & (cols == 0), partial_loss, 0.0)
        blk = jnp.where((rows == 0) & (cols == 1), partial_cnt, blk)
        out_ref[...] = blk


def label_smoothing_cross_entropy(pred, target, *, smoothing=0.1, tm=None, tc=None):
    """pred: (N, C) float (f32 or bf16), target: (N,) int (-100 = ignore). Returns f32 scalar."""
    N, C = pred.shape
    confidence = 1.0 - smoothing
    itemsize = jnp.dtype(pred.dtype).itemsize

    cap = _vmem_capacity_bytes()
    budget = int(cap * 0.6)

    a_tm, a_tc = _pick_tiles(N, C, itemsize, budget)
    tm = a_tm if tm is None else int(tm)
    tc = a_tc if tc is None else int(tc)

    n_rows = _round_up(N, 8)
    tm = int(_round_up(max(8, min(tm, n_rows)), 8))
    # Guarantee >= 2 row steps so the "parallel" axis can shard across both TCs on v7x.
    if n_rows >= 16 and tm >= n_rows:
        tm = int(_round_up((n_rows + 1) // 2, 8))

    # Class tiling: either a single full-C block, or 128-aligned blocks with in-kernel
    # masking of the padded columns.
    if tc >= C:
        tc, c_pad = C, C
    else:
        tc = max(128, (tc // 128) * 128)
        if tc >= C:
            tc, c_pad = C, C
        else:
            c_pad = _round_up(C, tc)

    # Pad rows up to a tile multiple with ignore_index; pad classes with zeros (masked).
    n_pad = _round_up(N, tm)
    pad_r, pad_c = n_pad - N, c_pad - C
    if pad_r or pad_c:
        pred = jnp.pad(pred, ((0, pad_r), (0, pad_c)))
    if pad_r:
        target = jnp.pad(target, (0, pad_r), constant_values=-100)
    tgt2d = target.reshape(n_pad, 1).astype(jnp.int32)

    g_rows = n_pad // tm
    g_cls = c_pad // tc

    kernel = functools.partial(
        _ls_ce_kernel,
        smoothing=float(smoothing), confidence=float(confidence),
        c_real=int(C), tc=int(tc), mask_cols=(c_pad != C),
    )

    # Scoped-VMEM: double-buffered input block + C-wide f32 temps + per-row scratch,
    # capped below physical VMEM (keeps double-buffering alive on v7x's 64 MiB).
    vmem_need = (2 * tm * tc * itemsize + 6 * tm * tc * 4 + 4 * tm * 4
                 + 2 * 8 * 128 * 4 + (2 << 20))
    vmem_limit = int(min(cap * 7 // 8, max(32 * 1024 * 1024, vmem_need)))

    cost = pl.CostEstimate(
        flops=int(5 * n_pad * c_pad),
        transcendentals=int(n_pad * c_pad),
        bytes_accessed=int(n_pad * c_pad * itemsize + n_pad * 4 * g_cls
                           + g_rows * 8 * 128 * 4),
    )

    partials = pl.pallas_call(
        kernel,
        out_shape=jax.ShapeDtypeStruct((g_rows * 8, 128), jnp.float32),
        grid_spec=pltpu.PrefetchScalarGridSpec(
            num_scalar_prefetch=0,
            grid=(g_rows, g_cls),
            in_specs=[
                pl.BlockSpec((tm, tc), lambda i, k: (i, k)),   # pred tile
                pl.BlockSpec((tm, 1), lambda i, k: (i, 0)),    # target tile
            ],
            out_specs=pl.BlockSpec((8, 128), lambda i, k: (i, 0)),
            scratch_shapes=[pltpu.VMEM((tm, 1), jnp.float32)] * 4,  # m, l, sum_x, x_tgt
        ),
        compiler_params=pltpu.CompilerParams(
            dimension_semantics=("parallel", "arbitrary"),
            vmem_limit_bytes=vmem_limit,
        ),
        cost_estimate=cost,
    )(pred, tgt2d)

    loss_sum = jnp.sum(partials[:, 0])
    cnt = jnp.sum(partials[:, 1])
    # Matches the PyTorch module: if every target is -100 this is 0/0 (NaN).
    return loss_sum / cnt


def _reference(pred, target, smoothing=0.1):
    confidence = 1.0 - smoothing
    C = pred.shape[-1]
    logp = jax.nn.log_softmax(pred.astype(jnp.float32), axis=-1)
    smooth_val = smoothing / (C - 1)
    onehot = jax.nn.one_hot(jnp.clip(target, 0, C - 1), C, dtype=jnp.float32)
    true_dist = jnp.full_like(logp, smooth_val) * (1.0 - onehot) + confidence * onehot
    mask = (target != -100).astype(jnp.float32)[:, None]
    loss = jnp.sum(-true_dist * logp * mask)
    return loss / jnp.sum(target != -100)


if __name__ == "__main__":
    key = jax.random.PRNGKey(0)
    N, C = 16, 128
    kp, kt = jax.random.split(key)
    pred = jax.random.normal(kp, (N, C), dtype=jnp.float32)
    target = jax.random.randint(kt, (N,), 0, C, dtype=jnp.int32)
    target = target.at[3].set(-100)  # exercise the ignore_index mask

    loss = jax.block_until_ready(label_smoothing_cross_entropy(pred, target, smoothing=0.1))
    ref = _reference(pred, target, smoothing=0.1)
    assert jnp.allclose(loss, ref, rtol=1e-5, atol=1e-5), (loss, ref)

    # bf16 input + row padding (N not a multiple of 8).
    pred_bf16 = jax.random.normal(kp, (13, C), dtype=jnp.bfloat16)
    tgt2 = jax.random.randint(kt, (13,), 0, C, dtype=jnp.int32)
    loss2 = jax.block_until_ready(label_smoothing_cross_entropy(pred_bf16, tgt2, smoothing=0.1))
    ref2 = _reference(pred_bf16.astype(jnp.float32), tgt2, smoothing=0.1)
    assert jnp.allclose(loss2, ref2, rtol=1e-3, atol=1e-3), (loss2, ref2)

    # Class-split (online logsumexp) path with column padding/masking and multiple
    # row + class grid steps (forced small tiles).
    N3, C3 = 24, 200
    kp3, kt3 = jax.random.split(jax.random.PRNGKey(1))
    pred3 = jax.random.normal(kp3, (N3, C3), dtype=jnp.float32)
    tgt3 = jax.random.randint(kt3, (N3,), 0, C3, dtype=jnp.int32)
    tgt3 = tgt3.at[0].set(-100)
    loss3 = jax.block_until_ready(
        label_smoothing_cross_entropy(pred3, tgt3, smoothing=0.2, tm=8, tc=128))
    ref3 = _reference(pred3, tgt3, smoothing=0.2)
    assert jnp.allclose(loss3, ref3, rtol=1e-5, atol=1e-5), (loss3, ref3)

    print("KERNEL_OK")
</pallas_src>

<mosaic_0001>
module attributes {stable_mosaic.version = 11 : i64} {
  func.func @_ls_ce_kernel(%arg0: i32, %arg1: i32, %arg2: memref<8x128xf32, #tpu.memory_space<vmem>>, %arg3: memref<8x1xi32, #tpu.memory_space<vmem>>, %arg4: memref<8x128xf32, #tpu.memory_space<vmem>>, %arg5: memref<8x1xf32, #tpu.memory_space<vmem>>, %arg6: memref<8x1xf32, #tpu.memory_space<vmem>>, %arg7: memref<8x1xf32, #tpu.memory_space<vmem>>, %arg8: memref<8x1xf32, #tpu.memory_space<vmem>>) attributes {dimension_semantics = [#tpu.dimension_semantics<parallel>, #tpu.dimension_semantics<arbitrary>], iteration_bounds = array<i64: 2, 1>, scalar_prefetch = 0 : i64, scratch_operands = 4 : i64, tpu.core_type = #tpu.core_type<tc>, window_params = [{transform_indices = @transform_0, window_bounds = array<i64: 8, 128>}, {transform_indices = @transform_1, window_bounds = array<i64: 8, 1>}, {transform_indices = @transform_2, window_bounds = array<i64: 8, 128>}]} {
    %c0_i32 = arith.constant 0 : i32
    %0 = arith.cmpi eq, %arg1, %c0_i32 : i32
    %1 = arith.extui %0 : i1 to i32
    %c0_i32_0 = arith.constant 0 : i32
    %2 = arith.cmpi ne, %1, %c0_i32_0 : i32
    scf.if %2 {
      %cst_26 = arith.constant 0xFF800000 : f32
      %42 = vector.broadcast %cst_26 : f32 to vector<8x1xf32>
      %c0_27 = arith.constant 0 : index
      %c0_28 = arith.constant 0 : index
      %43 = vector.load %arg5[%c0_27, %c0_28] : memref<8x1xf32, #tpu.memory_space<vmem>>, vector<8x1xf32>
      tpu.vector_store %arg5[%c0_27, %c0_28], %42 {strides = array<i32>} : memref<8x1xf32, #tpu.memory_space<vmem>>, vector<8x1xf32>,
      %cst_29 = arith.constant 0.000000e+00 : f32
      %44 = vector.broadcast %cst_29 : f32 to vector<8x1xf32>
      %c0_30 = arith.constant 0 : index
      %c0_31 = arith.constant 0 : index
      %45 = vector.load %arg6[%c0_30, %c0_31] : memref<8x1xf32, #tpu.memory_space<vmem>>, vector<8x1xf32>
      tpu.vector_store %arg6[%c0_30, %c0_31], %44 {strides = array<i32>} : memref<8x1xf32, #tpu.memory_space<vmem>>, vector<8x1xf32>,
      %cst_32 = arith.constant 0.000000e+00 : f32
      %46 = vector.broadcast %cst_32 : f32 to vector<8x1xf32>
      %c0_33 = arith.constant 0 : index
      %c0_34 = arith.constant 0 : index
      %47 = vector.load %arg7[%c0_33, %c0_34] : memref<8x1xf32, #tpu.memory_space<vmem>>, vector<8x1xf32>
      tpu.vector_store %arg7[%c0_33, %c0_34], %46 {strides = array<i32>} : memref<8x1xf32, #tpu.memory_space<vmem>>, vector<8x1xf32>,
      %cst_35 = arith.constant 0.000000e+00 : f32
      %48 = vector.broadcast %cst_35 : f32 to vector<8x1xf32>
      %c0_36 = arith.constant 0 : index
      %c0_37 = arith.constant 0 : index
      %49 = vector.load %arg8[%c0_36, %c0_37] : memref<8x1xf32, #tpu.memory_space<vmem>>, vector<8x1xf32>
      tpu.vector_store %arg8[%c0_36, %c0_37], %48 {strides = array<i32>} : memref<8x1xf32, #tpu.memory_space<vmem>>, vector<8x1xf32>,
    } else {
    }
    %c0 = arith.constant 0 : index
    %c0_1 = arith.constant 0 : index
    %3 = vector.load %arg2[%c0, %c0_1] : memref<8x128xf32, #tpu.memory_space<vmem>>, vector<8x128xf32>
    %c0_2 = arith.constant 0 : index
    %c0_3 = arith.constant 0 : index
    %4 = vector.load %arg3[%c0_2, %c0_3] : memref<8x1xi32, #tpu.memory_space<vmem>>, vector<8x1xi32>
    %5 = tpu.iota {dimensions = array<i32: 1>} : vector<8x128xi32>
    %c128_i32 = arith.constant 128 : i32
    %6 = arith.muli %arg1, %c128_i32 : i32
    %7 = vector.broadcast %6 : i32 to vector<8x128xi32>
    %8 = arith.addi %5, %7 : vector<8x128xi32>
    %c0_4 = arith.constant 0 : index
    %c0_5 = arith.constant 0 : index
    %9 = vector.load %arg5[%c0_4, %c0_5] : memref<8x1xf32, #tpu.memory_space<vmem>>, vector<8x1xf32>
    %cst = arith.constant dense<0xFF800000> : vector<8xf32>
    %10 = vector.multi_reduction <maximumf>, %3, %cst [1] : vector<8x128xf32> to vector<8xf32>
    %11 = vector.shape_cast %10 : vector<8xf32> to vector<8x1xf32>
    %12 = arith.maximumf %9, %11 : vector<8x1xf32>
    %13 = arith.subf %9, %12 : vector<8x1xf32>
    %14 = math.exp %13 : vector<8x1xf32>
    %c0_6 = arith.constant 0 : index
    %c0_7 = arith.constant 0 : index
    %15 = vector.load %arg6[%c0_6, %c0_7] : memref<8x1xf32, #tpu.memory_space<vmem>>, vector<8x1xf32>
    %16 = arith.mulf %14, %15 : vector<8x1xf32>
    %17 = vector.broadcast %12 : vector<8x1xf32> to vector<8x128xf32>
    %18 = arith.subf %3, %17 : vector<8x128xf32>
    %19 = math.exp %18 : vector<8x128xf32>
    %cst_8 = arith.constant dense<0.000000e+00> : vector<8xf32>
    %20 = vector.multi_reduction <add>, %19, %cst_8 [1] : vector<8x128xf32> to vector<8xf32>
    %21 = vector.shape_cast %20 : vector<8xf32> to vector<8x1xf32>
    %22 = arith.addf %16, %21 : vector<8x1xf32>
    %c0_9 = arith.constant 0 : index
    %c0_10 = arith.constant 0 : index
    %23 = vector.load %arg6[%c0_9, %c0_10] : memref<8x1xf32, #tpu.memory_space<vmem>>, vector<8x1xf32>
    tpu.vector_store %arg6[%c0_9, %c0_10], %22 {strides = array<i32>} : memref<8x1xf32, #tpu.memory_space<vmem>>, vector<8x1xf32>,
    %c0_11 = arith.constant 0 : index
    %c0_12 = arith.constant 0 : index
    %24 = vector.load %arg5[%c0_11, %c0_12] : memref<8x1xf32, #tpu.memory_space<vmem>>, vector<8x1xf32>
    tpu.vector_store %arg5[%c0_11, %c0_12], %12 {strides = array<i32>} : memref<8x1xf32, #tpu.memory_space<vmem>>, vector<8x1xf32>,
    %c0_13 = arith.constant 0 : index
    %c0_14 = arith.constant 0 : index
    %25 = vector.load %arg7[%c0_13, %c0_14] : memref<8x1xf32, #tpu.memory_space<vmem>>, vector<8x1xf32>
    %cst_15 = arith.constant dense<0.000000e+00> : vector<8xf32>
    %26 = vector.multi_reduction <add>, %3, %cst_15 [1] : vector<8x128xf32> to vector<8xf32>
    %27 = vector.shape_cast %26 : vector<8xf32> to vector<8x1xf32>
    %28 = arith.addf %25, %27 : vector<8x1xf32>
    %c0_16 = arith.constant 0 : index
    %c0_17 = arith.constant 0 : index
    %29 = vector.load %arg7[%c0_16, %c0_17] : memref<8x1xf32, #tpu.memory_space<vmem>>, vector<8x1xf32>
    tpu.vector_store %arg7[%c0_16, %c0_17], %28 {strides = array<i32>} : memref<8x1xf32, #tpu.memory_space<vmem>>, vector<8x1xf32>,
    %c0_18 = arith.constant 0 : index
    %c0_19 = arith.constant 0 : index
    %30 = vector.load %arg8[%c0_18, %c0_19] : memref<8x1xf32, #tpu.memory_space<vmem>>, vector<8x1xf32>
    %31 = vector.broadcast %4 : vector<8x1xi32> to vector<8x128xi32>
    %32 = arith.cmpi eq, %8, %31 : vector<8x128xi32>
    %cst_20 = arith.constant 0.000000e+00 : f32
    %33 = vector.broadcast %cst_20 : f32 to vector<8x128xf32>
    %34 = arith.select %32, %3, %33 : vector<8x128xi1>, vector<8x128xf32>
    %cst_21 = arith.constant dense<0.000000e+00> : vector<8xf32>
    %35 = vector.multi_reduction <add>, %34, %cst_21 [1] : vector<8x128xf32> to vector<8xf32>
    %36 = vector.shape_cast %35 : vector<8xf32> to vector<8x1xf32>
    %37 = arith.addf %30, %36 : vector<8x1xf32>
    %c0_22 = arith.constant 0 : index
    %c0_23 = arith.constant 0 : index
    %38 = vector.load %arg8[%c0_22, %c0_23] : memref<8x1xf32, #tpu.memory_space<vmem>>, vector<8x1xf32>
    tpu.vector_store %arg8[%c0_22, %c0_23], %37 {strides = array<i32>} : memref<8x1xf32, #tpu.memory_space<vmem>>, vector<8x1xf32>,
    %c0_i32_24 = arith.constant 0 : i32
    %39 = arith.cmpi eq, %arg1, %c0_i32_24 : i32
    %40 = arith.extui %39 : i1 to i32
    %c0_i32_25 = arith.constant 0 : i32
    %41 = arith.cmpi ne, %40, %c0_i32_25 : i32
    scf.if %41 {
      %c0_26 = arith.constant 0 : index
      %c0_27 = arith.constant 0 : index
      %42 = vector.load %arg5[%c0_26, %c0_27] : memref<8x1xf32, #tpu.memory_space<vmem>>, vector<8x1xf32>
      %c0_28 = arith.constant 0 : index
      %c0_29 = arith.constant 0 : index
      %43 = vector.load %arg6[%c0_28, %c0_29] : memref<8x1xf32, #tpu.memory_space<vmem>>, vector<8x1xf32>
      %44 = math.log %43 : vector<8x1xf32>
      %45 = arith.addf %42, %44 : vector<8x1xf32>
      %c-100_i32 = arith.constant -100 : i32
      %46 = vector.broadcast %c-100_i32 : i32 to vector<8x1xi32>
      %47 = arith.cmpi ne, %4, %46 : vector<8x1xi32>
      %48 = arith.extui %47 : vector<8x1xi1> to vector<8x1xi32>
      %49 = arith.sitofp %48 : vector<8x1xi32> to vector<8x1xf32>
      %cst_30 = arith.constant 1.280000e+02 : f32
      %50 = vector.broadcast %cst_30 : f32 to vector<8x1xf32>
      %51 = arith.mulf %50, %45 : vector<8x1xf32>
      %c0_31 = arith.constant 0 : index
      %c0_32 = arith.constant 0 : index
      %52 = vector.load %arg7[%c0_31, %c0_32] : memref<8x1xf32, #tpu.memory_space<vmem>>, vector<8x1xf32>
      %53 = arith.subf %51, %52 : vector<8x1xf32>
      %cst_33 = arith.constant 7.87401571E-4 : f32
      %54 = vector.broadcast %cst_33 : f32 to vector<8x1xf32>
      %55 = arith.mulf %54, %53 : vector<8x1xf32>
      %c0_34 = arith.constant 0 : index
      %c0_35 = arith.constant 0 : index
      %56 = vector.load %arg8[%c0_34, %c0_35] : memref<8x1xf32, #tpu.memory_space<vmem>>, vector<8x1xf32>
      %57 = arith.subf %45, %56 : vector<8x1xf32>
      %cst_36 = arith.constant 0.899212599 : f32
      %58 = vector.broadcast %cst_36 : f32 to vector<8x1xf32>
      %59 = arith.mulf %58, %57 : vector<8x1xf32>
      %60 = arith.addf %55, %59 : vector<8x1xf32>
      %61 = arith.mulf %60, %49 : vector<8x1xf32>
      %62 = vector.shape_cast %61 : vector<8x1xf32> to vector<1x8x1xf32>
      %cst_37 = arith.constant dense<0.000000e+00> : vector<1xf32>
      %63 = vector.multi_reduction <add>, %62, %cst_37 [1, 2] : vector<1x8x1xf32> to vector<1xf32>
      %64 = vector.shape_cast %63 : vector<1xf32> to vector<1x1x1xf32>
      %65 = vector.extract %64[0, 0, 0] : f32 from vector<1x1x1xf32>
      %66 = vector.shape_cast %49 : vector<8x1xf32> to vector<1x8x1xf32>
      %cst_38 = arith.constant dense<0.000000e+00> : vector<1xf32>
      %67 = vector.multi_reduction <add>, %66, %cst_38 [1, 2] : vector<1x8x1xf32> to vector<1xf32>
      %68 = vector.shape_cast %67 : vector<1xf32> to vector<1x1x1xf32>
      %69 = vector.extract %68[0, 0, 0] : f32 from vector<1x1x1xf32>
      %70 = tpu.iota {dimensions = array<i32: 0>} : vector<8x128xi32>
      %71 = tpu.iota {dimensions = array<i32: 1>} : vector<8x128xi32>
      %c0_i32_39 = arith.constant 0 : i32
      %72 = vector.broadcast %c0_i32_39 : i32 to vector<8x128xi32>
      %73 = arith.cmpi eq, %70, %72 : vector<8x128xi32>
      %c0_i32_40 = arith.constant 0 : i32
      %74 = vector.broadcast %c0_i32_40 : i32 to vector<8x128xi32>
      %75 = arith.cmpi eq, %71, %74 : vector<8x128xi32>
      %76 = arith.andi %73, %75 : vector<8x128xi1>
      %cst_41 = arith.constant 0.000000e+00 : f32
      %77 = vector.broadcast %65 : f32 to vector<8x128xf32>
      %78 = vector.broadcast %cst_41 : f32 to vector<8x128xf32>
      %79 = arith.select %76, %77, %78 : vector<8x128xi1>, vector<8x128xf32>
      %c0_i32_42 = arith.constant 0 : i32
      %80 = vector.broadcast %c0_i32_42 : i32 to vector<8x128xi32>
      %81 = arith.cmpi eq, %70, %80 : vector<8x128xi32>
      %c1_i32 = arith.constant 1 : i32
      %82 = vector.broadcast %c1_i32 : i32 to vector<8x128xi32>
      %83 = arith.cmpi eq, %71, %82 : vector<8x128xi32>
      %84 = arith.andi %81, %83 : vector<8x128xi1>
      %85 = vector.broadcast %69 : f32 to vector<8x128xf32>
      %86 = arith.select %84, %85, %79 : vector<8x128xi1>, vector<8x128xf32>
      %c0_43 = arith.constant 0 : index
      %c0_44 = arith.constant 0 : index
      %87 = vector.load %arg4[%c0_43, %c0_44] : memref<8x128xf32, #tpu.memory_space<vmem>>, vector<8x128xf32>
      tpu.vector_store %arg4[%c0_43, %c0_44], %86 {strides = array<i32>} : memref<8x128xf32, #tpu.memory_space<vmem>>, vector<8x128xf32>,
    } else {
    }
    return
  }
  func.func @transform_0(%arg0: i32, %arg1: i32) -> (i32, i32) {
    %c0_i32 = arith.constant 0 : i32
    return %arg0, %arg1 : i32, i32
  }
  func.func @transform_1(%arg0: i32, %arg1: i32) -> (i32, i32) {
    %c0_i32 = arith.constant 0 : i32
    %c0_i32_0 = arith.constant 0 : i32
    return %arg0, %c0_i32 : i32, i32
  }
  func.func @transform_2(%arg0: i32, %arg1: i32) -> (i32, i32) {
    %c0_i32 = arith.constant 0 : i32
    %c0_i32_0 = arith.constant 0 : i32
    return %arg0, %c0_i32 : i32, i32
  }
}

</mosaic_0001>

<llo_original>
// kernel: tpu_custom_call.1
$region0: #{tpu_custom_call.1}
  #allocation0 [shape = 'u32[]', space=smem, size = 0x4, offset = 0x4, fixed_abs, tag = 'smem constant byte address 0x4 - core index']
  #allocation1 [shape = 'u32[144,128]{1,0:T(1,128)}', space=vmem, size = 0x12000, scoped, tag = 'internal scratch']
  #allocation2 [shape = 'f32[8,1]{1,0:T(8,128)}', space=vmem, size = 0x1000, scoped, tag = 'scratch operand']
  #allocation3 [shape = 'f32[8,1]{1,0:T(8,128)}', space=vmem, size = 0x1000, scoped, tag = 'scratch operand']
  #allocation4 [shape = 'f32[8,1]{1,0:T(8,128)}', space=vmem, size = 0x1000, scoped, tag = 'scratch operand']
  #allocation5 [shape = 'f32[8,1]{1,0:T(8,128)}', space=vmem, size = 0x1000, scoped, tag = 'scratch operand']
  %s0 = inlined_call_operand.vmem [shape: f32[16,128], index: 0, kind: input, shape index: {}]
  %s1 = inlined_call_operand.vmem [shape: s32[16,1], index: 1, kind: input, shape index: {}]
  %s2 = inlined_call_operand.hbm [shape: f32[16,128], index: 2, kind: output, shape index: {}]
  %s3 = sld [smem:[#allocation0]]
  $region49: #{tpu_custom_call.1} parent=0
    _
  %s5 = ssub.s32 1, %s3
  %s6 = scalar_select 0, %s5, %s3
  $region1: #{tpu_custom_call.1} parent=0
    #allocation6 [shape = 'u8[8192]{0}', space=vmem, size = 0x2000, scoped, tag = 'output window, operand 0']
    #allocation7 [shape = 's32[2]{0}', space=sflag, size = 0x8, scoped, tag = 'scoped memory for tpu_custom_call.1']
    %7 = vsyncpa [#allocation7], 0
    %s8 = scalar_lea.sflag [#allocation7], 1
    %9 = vsyncpa %s8, 0
    loop: start=0, step=1, limit=4
    $region2: #{tpu_custom_call.1} parent=1 // loop_pre_header
      _
    $region3: #{tpu_custom_call.1} parent=1 // loop_header
      %s11 = sphi 0, %s15
      %p12 = scmp.ge.s32.totalorder %s11, 4
      %s18 = sphi 0, %s30
      %s19 = sphi 0, %s26
      %s20 = sphi 0, %s18
      %s21 = sphi 0, %s19
      %s22 = sphi 0, %s20
      %s23 = sphi 0, %s21
      %s35 = sphi 0, %s37
      %s38 = sphi 0, %s35
      %s39 = sphi 0, %s38
      %s55 = sphi 0, %s39
      %s61 = sphi 0, %s63
      %s64 = sphi 0, %s61
      %s65 = sphi 0, %s64
      %s81 = sphi 0, %s65
      %s87 = sphi 0, %s89
      %s90 = sphi 0, %s87
      %s91 = sphi 0, %s90
      %s107 = sphi 0, %s91
    $region4: #{tpu_custom_call.1} parent=1 // loop_header_branch
      %14 = sbr.rel (%p12) target = $region8
    $region5: #{tpu_custom_call.1} parent=1 // loop_body
      %s16 = ssub.s32 %s11, 1
      %s17 = ssub.s32 %s11, 2
      %s24 = sadd.s32 1, %s19
      %p25 = scmp.ge.s32.totalorder %s24, 1
      %s26 = scalar_select %p25, 0, %s24
      %s27 = sadd.s32 1, %s18
      %s28 = scalar_select %p25, %s27, %s18
      %p29 = scmp.ge.s32.totalorder %s28, 2
      %s30 = scalar_select %p29, 0, %s28
      %s31 = ssub.s32 %s18, %s30
      %s32 = ssub.s32 %s19, %s26
      %s33 = sor.u32 %s31, %s32
      %p34 = scmp.eq.s32.totalorder %s33, 0
      %s36 = sadd.s32 %s35, 1
      %s37 = scalar_select %p34, %s35, %s36
      %p40 = pneg %p34
      %p41 = scmp.eq.s32.totalorder %s11, 1
      %p42 = por %p40, %p41
      %p43 = scmp.ne.s32.totalorder %s35, %s38
      %p44 = scmp.eq.s32.totalorder %s11, 0
      %p45 = por %p43, %p44
      %p46 = scmp.ne.s32.totalorder %s35, %s38
      %p47 = scmp.eq.s32.totalorder %s16, 1
      %p48 = por %p46, %p47
      %p49 = scmp.ne.s32.totalorder %s38, %s39
      %p50 = scmp.eq.s32.totalorder %s16, 0
      %p51 = por %p49, %p50
      %p52 = scmp.ne.s32.totalorder %s38, %s39
      %p53 = scmp.eq.s32.totalorder %s17, 1
      %p54 = por %p52, %p53
      %p56 = scmp.ne.s32.totalorder %s39, %s55
      %p57 = scmp.eq.s32.totalorder %s17, 0
      %p58 = por %p56, %p57
      %s59 = ssub.s32 %s18, %s30
      %p60 = scmp.eq.s32.totalorder %s59, 0
      %s62 = sadd.s32 %s61, 1
      %s63 = scalar_select %p60, %s61, %s62
      %p66 = pneg %p60
      %p67 = scmp.eq.s32.totalorder %s11, 1
      %p68 = por %p66, %p67
      %p69 = scmp.ne.s32.totalorder %s61, %s64
      %p70 = scmp.eq.s32.totalorder %s11, 0
      %p71 = por %p69, %p70
      %p72 = scmp.ne.s32.totalorder %s61, %s64
      %p73 = scmp.eq.s32.totalorder %s16, 1
      %p74 = por %p72, %p73
      %p75 = scmp.ne.s32.totalorder %s64, %s65
      %p76 = scmp.eq.s32.totalorder %s16, 0
      %p77 = por %p75, %p76
      %p78 = scmp.ne.s32.totalorder %s64, %s65
      %p79 = scmp.eq.s32.totalorder %s17, 1
      %p80 = por %p78, %p79
      %p82 = scmp.ne.s32.totalorder %s65, %s81
      %p83 = scmp.eq.s32.totalorder %s17, 0
      %p84 = por %p82, %p83
      %s85 = ssub.s32 %s18, %s30
      %p86 = scmp.eq.s32.totalorder %s85, 0
      %s88 = sadd.s32 %s87, 1
      %s89 = scalar_select %p86, %s87, %s88
      %p92 = pneg %p86
      %p93 = scmp.eq.s32.totalorder %s11, 1
      %p94 = por %p92, %p93
      %p95 = scmp.ne.s32.totalorder %s87, %s90
      %p96 = scmp.eq.s32.totalorder %s11, 0
      %p97 = por %p95, %p96
      %p98 = scmp.ne.s32.totalorder %s87, %s90
      %p99 = scmp.eq.s32.totalorder %s16, 1
      %p100 = por %p98, %p99
      %p101 = scmp.ne.s32.totalorder %s90, %s91
      %p102 = scmp.eq.s32.totalorder %s16, 0
      %p103 = por %p101, %p102
      %p104 = scmp.ne.s32.totalorder %s90, %s91
      %p105 = scmp.eq.s32.totalorder %s17, 1
      %p106 = por %p104, %p105
      %p108 = scmp.ne.s32.totalorder %s91, %s107
      %p109 = scmp.eq.s32.totalorder %s17, 0
      %p110 = por %p108, %p109
      %p111 = scmp.le.s32.totalorder 1, %s11
      %p112 = scmp.lt.s32.totalorder %s11, 3
      %p113 = pnand %p111, %p112
      %p114 = pneg %p113
      // Predicated region
      $region9: #{tpu_custom_call.1} parent=5 // pred_check
        _
      $region10: #{tpu_custom_call.1} parent=5 // pred_check_branch
        %116 = sbr.rel (%p113) target = $region12
      $region11: #{tpu_custom_call.1} parent=5 // pred_region
        %s117 = ssub.s32 %s11, 1
      $region12: #{tpu_custom_call.1} parent=5 // pred_fallthru
        _
      %p118 = scmp.lt.s32.totalorder %s11, 2
      // Predicated region
      $region13: #{tpu_custom_call.1} parent=5 // pred_check
        %p119 = pneg %p118
      $region14: #{tpu_custom_call.1} parent=5 // pred_check_branch
        %121 = sbr.rel (%p119) target = $region16
      $region15: #{tpu_custom_call.1} parent=5 // pred_region
        // Predicated region
        $region17: #{tpu_custom_call.1} parent=15 // pred_check
          %p122 = pneg %p45
        $region18: #{tpu_custom_call.1} parent=15 // pred_check_branch
          %124 = sbr.rel (%p122) target = $region20
        $region19: #{tpu_custom_call.1} parent=15 // pred_region
          %p125 = scmp.lt.s32.totalorder %s18, 1
          %s126 = scalar_select %p125, %s18, 1
          %p127 = scmp.lt.s32.totalorder %s19, 0
          %s128 = scalar_select %p127, %s19, 0
          %s129 = sadd.s32 %s128, %s126
          %s130 = smul.addr %s129, 8
          %s131 = scalar_lea.vmem %s0, %s130
        $region20: #{tpu_custom_call.1} parent=15 // pred_fallthru
          _
        // Predicated region
        $region21: #{tpu_custom_call.1} parent=15 // pred_check
          %p132 = pneg %p71
        $region22: #{tpu_custom_call.1} parent=15 // pred_check_branch
          %134 = sbr.rel (%p132) target = $region24
        $region23: #{tpu_custom_call.1} parent=15 // pred_region
          %p135 = scmp.lt.s32.totalorder %s18, 1
          %s136 = scalar_select %p135, %s18, 1
          %s137 = smul.addr %s136, 8
          %s138 = scalar_lea.vmem %s1, %s137
        $region24: #{tpu_custom_call.1} parent=15 // pred_fallthru
          _
      $region16: #{tpu_custom_call.1} parent=5 // pred_fallthru
        _
      %p139 = scmp.le.s32.totalorder 1, %s11
      %p140 = scmp.lt.s32.totalorder %s11, 3
      %p141 = pnand %p139, %p140
      %p142 = pneg %p141
      // Predicated region
      $region25: #{tpu_custom_call.1} parent=5 // pred_check
        _
      $region26: #{tpu_custom_call.1} parent=5 // pred_check_branch
        %144 = sbr.rel (%p141) target = $region28
      $region27: #{tpu_custom_call.1} parent=5 // pred_region
        %s145 = ssub.s32 %s11, 1
        %p146 = scmp.lt.s32.totalorder %s20, 1
        %s147 = scalar_select %p146, %s20, 1
        %p148 = scmp.lt.s32.totalorder %s21, 0
        %s149 = scalar_select %p148, %s21, 0
        %s150 = sadd.s32 %s149, %s147
        %s151 = smul.addr %s150, 8
        %s152 = scalar_lea.vmem %s0, %s151
        %p153 = pneg %p51
        %p154 = pneg %p48
        %p155 = scmp.lt.s32.totalorder %s20, 1
        %s156 = scalar_select %p155, %s20, 1
        %s157 = smul.addr %s156, 8
        %s158 = scalar_lea.vmem %s1, %s157
        %p159 = pneg %p77
        %p160 = pneg %p74
        %p161 = pneg %p103
        %p162 = pneg %p100
        %s163 = sand.u32 %s90, 1
        %s164 = scalar_lea.sflag [#allocation7], %s163
        %s165 = sand.u32 %s90, 1
        %s166 = smul.addr %s165, 8
        %s167 = scalar_lea.vmem [#allocation6], %s166
        %p168 = scmp.lt.s32.totalorder %s20, 1
        %s169 = scalar_select %p168, %s20, 1
        %p170 = scmp.lt.s32.totalorder %s21, 0
        %s171 = scalar_select %p170, %s21, 0
        %s172 = sadd.s32 %s171, %s169
        %s173 = smul.addr %s172, 8
        %s174 = scalar_lea.vmem %s0, %s173
        %p175 = scmp.lt.s32.totalorder %s20, 1
        %s176 = scalar_select %p175, %s20, 1
        %s177 = smul.addr %s176, 8
        %s178 = scalar_lea.vmem %s1, %s177
        %p179 = scmp.eq.s32.totalorder %s21, 0
        // Predicated region
        $region29: #{tpu_custom_call.1} parent=27 // pred_check
          %p180 = pneg %p179
        $region30: #{tpu_custom_call.1} parent=27 // pred_check_branch
          %182 = sbr.rel (%p180) target = $region32
        $region31: #{tpu_custom_call.1} parent=27 // pred_region
          %vm183 = vcmask 7168
          %184 = vst.msk [vmem:[#allocation2] sm:$0xff] %vm183, -inf
          %185 = vst.msk [vmem:[#allocation3] sm:$0xff] %vm183, 0.0
          %186 = vst.msk [vmem:[#allocation4] sm:$0xff] %vm183, 0.0
          %187 = vst.msk [vmem:[#allocation5] sm:$0xff] %vm183, 0.0
        $region32: #{tpu_custom_call.1} parent=27 // pred_fallthru
          _
        %v188 = vld [vmem:[%s174] sm:$0xff]
        %v189 = vld [vmem:[%s178] sm:$0xff]
        %v190 = vlaneseq
        %v191 = vand.u32 %v190, 127
        %s192 = smul.u32 %s21, 128
        %v193 = vstv %s192
        %v194 = vadd.s32 %v191, %v193
        %v195 = vld [vmem:[#allocation2] sm:$0xff]
        %196 = vmax.xlane.f32.xlu0 %v188
        %v197 = vpop.xlane.xlu0 %196
        %v198 = vmax.f32 %v195, %v197
        %v199 = vsub.f32 %v195, %v198
        %v200 = vmul.f32 %v199, 1.442695
        %v201 = vpow.pop %v200
        %v202 = vld [vmem:[#allocation3] sm:$0xff]
        %v203 = vmul.f32 %v201, %v202
        %205 = vset.pattern.permute.xlu0 0
        %206 = vperm.xlu0 %205, %v198
        %v207 = vpop.permute.xlu0 %206
        %v209 = vsub.f32 %v188, %v207
        %v210 = vmul.f32 %v209, 1.442695
        %v211 = vpow.pop %v210
        %212 = vadd.xlane.f32.xlu0 %v211
        %v213 = vpop.xlane.xlu0 %212
        %v214 = vadd.f32 %v203, %v213
        %vm215 = vcmask 7168
        %216 = vst.msk [vmem:[#allocation3] sm:$0xff] %vm215, %v214
        %217 = vst.msk [vmem:[#allocation2] sm:$0xff] %vm215, %v198
        %v218 = vld [vmem:[#allocation4] sm:$0xff]
        %219 = vadd.xlane.f32.xlu0 %v188
        %v220 = vpop.xlane.xlu0 %219
        %v221 = vadd.f32 %v218, %v220
        %222 = vst.msk [vmem:[#allocation4] sm:$0xff] %vm215, %v221
        %v223 = vld [vmem:[#allocation5] sm:$0xff]
        %224 = vset.pattern.permute.xlu0 0
        %225 = vperm.xlu0 %224, %v189
        %v226 = vpop.permute.xlu0 %225
        %vm227 = vcmp.eq.s32.totalorder %v194, %v226
        %v228 = vsel %vm227, %v188, 0.0
        %229 = vadd.xlane.f32.xlu0 %v228
        %v230 = vpop.xlane.xlu0 %229
        %v231 = vadd.f32 %v223, %v230
        %232 = vst.msk [vmem:[#allocation5] sm:$0xff] %vm215, %v231
        // Predicated region
        $region33: #{tpu_custom_call.1} parent=27 // pred_check
          %p233 = pneg %p179
        $region34: #{tpu_custom_call.1} parent=27 // pred_check_branch
          %235 = sbr.rel (%p233) target = $region36
        $region35: #{tpu_custom_call.1} parent=27 // pred_region
          %v236 = vld [vmem:[#allocation2] sm:$0xff]
          %v237 = vld [vmem:[#allocation3] sm:$0xff]
          %v238 = vlog2.pop %v237
          %v239 = vmul.f32 %v238, 0.6931472
          %v240 = vadd.f32 %v236, %v239
          %vm241 = vcmp.ne.s32.totalorder %v189, 4294967196
          %v242 = vsel %vm241, 1, 0
          %v243 = vcvt.s32.f32 %v242
          %v244 = vmul.f32 %v240, 128.0
          %v245 = vld [vmem:[#allocation4] sm:$0xff]
          %v246 = vsub.f32 %v244, %v245
          %v247 = vmul.f32 %v246, 0.0007874016
          %v248 = vld [vmem:[#allocation5] sm:$0xff]
          %v249 = vsub.f32 %v240, %v248
          %v250 = vmul.f32 %v249, 0.8992126
          %v251 = vadd.f32 %v247, %v250
          %v252 = vmul.f32 %v251, %v243
          %v253 = vsel %vm215, %v252, 0.0
          %254 = vadd.xlane.f32.xlu0 %v253
          %v255 = vpop.xlane.xlu0 %254
          %v256 = vrot.slane %v255, 4
          %v257 = vadd.f32 %v255, %v256
          %v258 = vrot.slane %v257, 2
          %v259 = vadd.f32 %v257, %v258
          %v260 = vrot.slane %v259, 1
          %v261 = vadd.f32 %v259, %v260
          %s262 = vtos %v261
          %v263 = vsel %vm215, %v243, 0.0
          %264 = vadd.xlane.f32.xlu0 %v263
          %v265 = vpop.xlane.xlu0 %264
          %v266 = vrot.slane %v265, 4
          %v267 = vadd.f32 %v265, %v266
          %v268 = vrot.slane %v267, 2
          %v269 = vadd.f32 %v267, %v268
          %v270 = vrot.slane %v269, 1
          %v271 = vadd.f32 %v269, %v270
          %s272 = vtos %v271
          %v273 = vlaneseq
          %v274 = vshrl.u32 %v273, 7
          %vm275 = vcmp.eq.s32.totalorder %v274, 0
          %vm276 = vcmp.eq.s32.totalorder %v191, 0
          %vm277 = vmand %vm275, %vm276
          %v278 = vstv %s262
          %v279 = vsel %vm277, %v278, 0.0
          %vm280 = vcmp.eq.s32.totalorder %v191, 1
          %vm281 = vmand %vm275, %vm280
          %v282 = vstv %s272
          %v283 = vsel %vm281, %v282, %v279
          %284 = vst [vmem:[%s167] sm:$0xff] %v283
        $region36: #{tpu_custom_call.1} parent=27 // pred_fallthru
          _
        %s285 = sand.u32 %s90, 1
        %s286 = scalar_lea.sflag [#allocation7], %s285
        %s287 = sand.u32 %s90, 1
        %s288 = smul.addr %s287, 8
        %s289 = scalar_lea.vmem [#allocation6], %s288
        // Predicated region
        $region37: #{tpu_custom_call.1} parent=27 // pred_check
          %p290 = pneg %p100
        $region38: #{tpu_custom_call.1} parent=27 // pred_check_branch
          %292 = sbr.rel (%p290) target = $region40
        $region39: #{tpu_custom_call.1} parent=27 // pred_region
          %s294 = ssub.s32 128, 128
          %295 = vsyncadd %s286, %s294
          %s296 = smul.addr %s20, 128
          %s297 = scalar_lea.hbm %s2, %s296
          %s299 = sshll.u32 %s289, 4
          %s300 = int_to_ptr.vmem [resolvable:$true] %s299
          %302 = dma.vmem_to_hbm [thread:$0]  %s300, 128, %s297, %s286
        $region40: #{tpu_custom_call.1} parent=27 // pred_fallthru
          _
      $region28: #{tpu_custom_call.1} parent=5 // pred_fallthru
        _
      %p303 = scmp.le.s32.totalorder 2, %s11
      // Predicated region
      $region41: #{tpu_custom_call.1} parent=5 // pred_check
        %p304 = pneg %p303
      $region42: #{tpu_custom_call.1} parent=5 // pred_check_branch
        %306 = sbr.rel (%p304) target = $region44
      $region43: #{tpu_custom_call.1} parent=5 // pred_region
        %s307 = ssub.s32 %s11, 2
        // Predicated region
        $region45: #{tpu_custom_call.1} parent=43 // pred_check
          %p308 = pneg %p106
        $region46: #{tpu_custom_call.1} parent=43 // pred_check_branch
          %310 = sbr.rel (%p308) target = $region48
        $region47: #{tpu_custom_call.1} parent=43 // pred_region
          %s311 = sand.u32 %s91, 1
          %s312 = scalar_lea.sflag [#allocation7], %s311
          %s313 = sand.u32 %s91, 1
          %s314 = smul.addr %s313, 8
          %s315 = scalar_lea.vmem [#allocation6], %s314
          %316 = dma.done %s312, 128
        $region48: #{tpu_custom_call.1} parent=43 // pred_fallthru
          _
      $region44: #{tpu_custom_call.1} parent=5 // pred_fallthru
        _
    $region6: #{tpu_custom_call.1} parent=1 // loop_footer
      %s15 = sadd.s32 1, %s11
    $region7: #{tpu_custom_call.1} parent=1 // loop_footer_branch
      %10 = sbr.rel target = $region3
    $region8: #{tpu_custom_call.1} parent=1 // loop_exit
      _
    %317 = vsyncpa [#allocation7], 1
    %s318 = scalar_lea.sflag [#allocation7], 1
    %319 = vsyncpa %s318, 1

</llo_original>
